<compile_context>
chip_gen: v7x
topology: tpu7x:2x2x1
jax: 0.10.0
libtpu: 0.0.40
codegen_flags: <defaults>
</compile_context>

<pallas_src>
import functools

import numpy as np
import jax
import jax.numpy as jnp
from jax.experimental import pallas as pl
from jax.experimental.pallas import tpu as pltpu


F_PAD = 128            # lane-dense padded feature width shared by every layer
K_PAD = 16             # padded contraction width (>= max fan-in / fan-out, multiple of 8)
A_SRC_COL = F_PAD - 2  # xp column holding a_src = (x @ W) @ att_src
A_DST_COL = F_PAD - 1  # xp column holding a_dst = (x @ W) @ att_dst


def _gats_block_kernel(x_ref, adj_ref, w_ref, scale_ref, shift_ref, o_ref, *, num_layers):
    """All GAT layers for ONE graph (one grid step); whole working set resident in VMEM."""
    # Additive attention mask, built once per graph and reused by every layer:
    #   0.0 where adj[dst, src] == 1 (edge or self-loop), -1e9 elsewhere.
    adjf = adj_ref[0].astype(jnp.float32)             # int8 {0,1} -> f32, (N, N)
    mask_bias = (adjf - 1.0) * jnp.float32(1e9)

    x = x_ref[0]                                      # (N, K_PAD) f32, padded cols are 0
    for l in range(num_layers):                       # static unroll (num_layers is small)
        # GATConv linear transform: bf16 operands, f32 accumulation (MXU-native).
        # Columns A_SRC_COL / A_DST_COL of W hold W@att_src / W@att_dst, so the attention
        # logits fall out of xp as lane slices -- no skinny matmuls.
        xp = jnp.dot(x.astype(jnp.bfloat16), w_ref[l],
                     preferred_element_type=jnp.float32)          # (N, F_PAD) f32
        a_src = xp[:, A_SRC_COL:A_SRC_COL + 1]        # (N, 1)
        a_dst = xp[:, A_DST_COL:A_DST_COL + 1]        # (N, 1)

        # e[i, j] = leaky_relu(a_dst[i] + a_src[j], 0.2), then mask non-edges to -1e9.
        e = a_dst + jnp.transpose(a_src)              # (N, N)
        e = jnp.maximum(e, 0.2 * e)                   # LeakyReLU as a single VALU max
        e = e + mask_bias

        # Softmax over source nodes j (axis=1). Every row has a self-loop, so the row max is
        # a real (finite) edge score; exp(-1e9 - m) underflows to exactly 0.0 in f32, hence
        # no second "zero the masked entries" select is needed.
        m = jnp.max(e, axis=1, keepdims=True)
        p = jnp.exp(e - m)
        denom = jnp.sum(p, axis=1, keepdims=True)
        attn = p * pl.reciprocal(denom, approx=True)  # EUP reciprocal + broadcast VPU mul

        # Aggregate + folded (bias + BatchNorm eval) scale/shift + ReLU.  The attention-logit
        # columns of xp pollute h[:, -2:], but scale/shift are zero there -> scrubbed.
        h = jnp.dot(attn, xp, preferred_element_type=jnp.float32)  # (N, F_PAD) f32
        h = h * scale_ref[l] + shift_ref[l]
        h = jnp.maximum(h, 0.0)                       # ReLU; Dropout is identity in eval

        o_ref[0, l] = h                               # lane-dense (N, 128) unmasked store
        if l + 1 < num_layers:
            x = h[:, :K_PAD]                          # feed next layer, never leaves chip


@jax.jit
def _run_fused(x_pad, adj_i8, w_s, scale_s, shift_s):
    bsz, n, _ = x_pad.shape
    num_layers = w_s.shape[0]
    return pl.pallas_call(
        functools.partial(_gats_block_kernel, num_layers=num_layers),
        out_shape=jax.ShapeDtypeStruct((bsz, num_layers, n, F_PAD), jnp.float32),
        grid=(bsz,),
        in_specs=[
            pl.BlockSpec((1, n, K_PAD), lambda b: (b, 0, 0)),                 # per-graph x
            pl.BlockSpec((1, n, n), lambda b: (b, 0, 0)),                     # per-graph adj
            pl.BlockSpec((num_layers, K_PAD, F_PAD), lambda b: (0, 0, 0)),    # shared weights
            pl.BlockSpec((num_layers, 1, F_PAD), lambda b: (0, 0, 0)),        # shared scale
            pl.BlockSpec((num_layers, 1, F_PAD), lambda b: (0, 0, 0)),        # shared shift
        ],
        out_specs=pl.BlockSpec((1, num_layers, n, F_PAD), lambda b: (b, 0, 0, 0)),
        compiler_params=pltpu.CompilerParams(
            dimension_semantics=("parallel",)),       # graphs are independent -> use both v7x TCs
    )(x_pad, adj_i8, w_s, scale_s, shift_s)


def pack_params(params, *, do_bn, eps=1e-5):
    """Pad params, fold att vectors into spare W columns, fold bias+BN into scale/shift."""
    ws, scales, shifts = [], [], []
    for p in params:
        fin, fout = p["w"].shape
        assert fin <= K_PAD and fout <= K_PAD and fout <= A_SRC_COL
        w = jnp.zeros((K_PAD, F_PAD), jnp.float32)
        w = w.at[:fin, :fout].set(p["w"])
        # Fold: column A_SRC_COL = W @ att_src, column A_DST_COL = W @ att_dst, so that
        # xp[:, A_SRC_COL] == (x @ W) @ att_src etc. (associativity).
        w = w.at[:fin, A_SRC_COL].set(p["w"] @ p["att_src"][0])
        w = w.at[:fin, A_DST_COL].set(p["w"] @ p["att_dst"][0])
        if do_bn:
            s = p["gamma"] * jax.lax.rsqrt(p["var"] + eps)         # (1, fout)
            t = p["beta"] + (p["bias"] - p["mean"]) * s
        else:
            s = jnp.ones_like(p["bias"])
            t = p["bias"]
        scale = jnp.zeros((1, F_PAD), jnp.float32).at[:, :fout].set(s)
        shift = jnp.zeros((1, F_PAD), jnp.float32).at[:, :fout].set(t)
        ws.append(w.astype(jnp.bfloat16))             # bf16 MXU operands, f32 accumulation
        scales.append(scale)
        shifts.append(shift)
    return jnp.stack(ws), jnp.stack(scales), jnp.stack(shifts)


def gats_block_forward(x, adj_i8, packed, mask_idx, out_dims):
    """Fused forward for a batch of graphs; returns per-layer h_l[mask] like the module."""
    bsz, n, f_in = x.shape
    x_pad = jnp.zeros((bsz, n, K_PAD), jnp.float32).at[:, :, :f_in].set(x)
    out = _run_fused(x_pad, adj_i8, *packed)          # (B, L, N, F_PAD)
    sel = jnp.take(out, mask_idx, axis=2)             # (B, L, n_mask, F_PAD)
    return [sel[:, l, :, :out_dims[l]] for l in range(len(out_dims))]


def reference_forward(x, adj_i8, packed, mask_idx, out_dims):
    """Pure-JAX mirror of the kernel math (same folding / bf16 rounding) for validation."""
    w_s, scale_s, shift_s = packed
    bsz, n, f_in = x.shape
    num_layers = w_s.shape[0]
    x_pad = jnp.zeros((bsz, n, K_PAD), jnp.float32).at[:, :, :f_in].set(x)
    per_layer = [[] for _ in range(num_layers)]
    for b in range(bsz):
        mask_bias = (adj_i8[b].astype(jnp.float32) - 1.0) * 1e9
        xb = x_pad[b]
        for l in range(num_layers):
            w = w_s[l].astype(jnp.float32)
            xp = xb.astype(jnp.bfloat16).astype(jnp.float32) @ w
            a_src = xp[:, A_SRC_COL:A_SRC_COL + 1]
            a_dst = xp[:, A_DST_COL:A_DST_COL + 1]
            e = a_dst + a_src.T
            e = jnp.maximum(e, 0.2 * e) + mask_bias
            p = jnp.exp(e - jnp.max(e, axis=1, keepdims=True))
            attn = p / jnp.sum(p, axis=1, keepdims=True)
            h = attn @ xp
            h = jnp.maximum(h * scale_s[l] + shift_s[l], 0.0)
            per_layer[l].append(h[mask_idx, :out_dims[l]])
            xb = h[:, :K_PAD]
    return [jnp.stack(o) for o in per_layer]


def build_adjacency(edge_index, num_nodes):
    """Dense int8 adj[dst, src] = 1 for each edge src->dst, plus self-loops (GATConv default)."""
    adj = np.zeros((num_nodes, num_nodes), dtype=np.int8)
    src, dst = edge_index
    adj[dst, src] = 1
    adj[np.arange(num_nodes), np.arange(num_nodes)] = 1
    return jnp.asarray(adj)


def init_params(key, dims):
    """Deterministic parameter init. dims = [n_features] + gnns_hidden."""
    params = []
    for i in range(len(dims) - 1):
        fin, fout = dims[i], dims[i + 1]
        key, k_w, k_as, k_ad, k_b = jax.random.split(key, 5)
        scale = 1.0 / np.sqrt(fin)
        params.append(dict(
            w=jax.random.normal(k_w, (fin, fout), jnp.float32) * scale,
            att_src=jax.random.normal(k_as, (1, fout), jnp.float32) * scale,
            att_dst=jax.random.normal(k_ad, (1, fout), jnp.float32) * scale,
            bias=jax.random.normal(k_b, (1, fout), jnp.float32) * 0.1,
            gamma=jnp.ones((1, fout), jnp.float32),
            beta=jnp.zeros((1, fout), jnp.float32),
            mean=jnp.zeros((1, fout), jnp.float32),
            var=jnp.ones((1, fout), jnp.float32),
        ))
    return params


if __name__ == "__main__":
    # Module config: layer_num=2, n_features=8, gnns_hidden=[16, 8], do_bn=True,
    # dropout=0.1 (identity in eval), bias=True.  Two graphs batched on the parallel axis.
    layer_num = 2
    n_features = 8
    gnns_hidden = [16, 8]
    do_bn = True
    num_nodes = 16
    num_edges = 40
    num_graphs = 2

    key = jax.random.PRNGKey(0)
    key, kx, ke_src, ke_dst = jax.random.split(key, 4)

    x = jax.random.normal(kx, (num_graphs, num_nodes, n_features), jnp.float32)
    edge_src = np.asarray(jax.random.randint(ke_src, (num_graphs, num_edges), 0, num_nodes))
    edge_dst = np.asarray(jax.random.randint(ke_dst, (num_graphs, num_edges), 0, num_nodes))
    adj_i8 = jnp.stack([
        build_adjacency(np.stack([edge_src[g], edge_dst[g]], axis=0), num_nodes)
        for g in range(num_graphs)
    ])                                                              # (B, N, N) int8

    mask = np.zeros((num_nodes,), dtype=bool)
    mask[::2] = True                                                # select even nodes
    mask_idx = jnp.asarray(np.nonzero(mask)[0], dtype=jnp.int32)

    dims = [n_features] + gnns_hidden
    params = init_params(key, dims)
    packed = pack_params(params, do_bn=do_bn)

    outs = gats_block_forward(x, adj_i8, packed, mask_idx, gnns_hidden)
    for o in outs:
        jax.block_until_ready(o)

    refs = reference_forward(x, adj_i8, packed, mask_idx, gnns_hidden)
    n_sel = int(mask.sum())
    for o, r, fo in zip(outs, refs, gnns_hidden):
        assert o.shape == (num_graphs, n_sel, fo)
        assert bool(jnp.all(jnp.isfinite(o)))
        # approx=True softmax reciprocal + bf16 MXU operands -> loose-ish tolerance.
        assert bool(jnp.allclose(o, r, rtol=2e-2, atol=2e-2))
    print("KERNEL_OK")
</pallas_src>

<mosaic_0001>
module attributes {stable_mosaic.version = 11 : i64} {
  func.func @_gats_block_kernel(%arg0: i32, %arg1: memref<1x16x16xf32, #tpu.memory_space<vmem>>, %arg2: memref<1x16x16xi8, #tpu.memory_space<vmem>>, %arg3: memref<2x16x128xbf16, #tpu.memory_space<vmem>>, %arg4: memref<2x1x128xf32, #tpu.memory_space<vmem>>, %arg5: memref<2x1x128xf32, #tpu.memory_space<vmem>>, %arg6: memref<1x2x16x128xf32, #tpu.memory_space<vmem>>) attributes {dimension_semantics = [#tpu.dimension_semantics<parallel>], iteration_bounds = array<i64: 2>, scalar_prefetch = 0 : i64, scratch_operands = 0 : i64, tpu.core_type = #tpu.core_type<tc>, window_params = [{transform_indices = @transform_0, window_bounds = array<i64: 1, 16, 16>}, {transform_indices = @transform_1, window_bounds = array<i64: 1, 16, 16>}, {pipeline_mode = #tpu.pipeline_mode<synchronous>, transform_indices = @transform_2, window_bounds = array<i64: 2, 16, 128>}, {pipeline_mode = #tpu.pipeline_mode<synchronous>, transform_indices = @transform_3, window_bounds = array<i64: 2, 1, 128>}, {pipeline_mode = #tpu.pipeline_mode<synchronous>, transform_indices = @transform_4, window_bounds = array<i64: 2, 1, 128>}, {transform_indices = @transform_5, window_bounds = array<i64: 1, 2, 16, 128>}]} {
    %c0 = arith.constant 0 : index
    %c0_0 = arith.constant 0 : index
    %c0_1 = arith.constant 0 : index
    %0 = vector.load %arg2[%c0, %c0_0, %c0_1] : memref<1x16x16xi8, #tpu.memory_space<vmem>>, vector<1x16x16xi8>
    %1 = vector.shape_cast %0 : vector<1x16x16xi8> to vector<16x16xi8>
    %2 = arith.sitofp %1 : vector<16x16xi8> to vector<16x16xf32>
    %cst = arith.constant 1.000000e+00 : f32
    %3 = vector.broadcast %cst : f32 to vector<16x16xf32>
    %4 = arith.subf %2, %3 : vector<16x16xf32>
    %cst_2 = arith.constant 1.000000e+09 : f32
    %5 = vector.broadcast %cst_2 : f32 to vector<16x16xf32>
    %6 = arith.mulf %4, %5 : vector<16x16xf32>
    %c0_3 = arith.constant 0 : index
    %c0_4 = arith.constant 0 : index
    %c0_5 = arith.constant 0 : index
    %7 = vector.load %arg1[%c0_3, %c0_4, %c0_5] : memref<1x16x16xf32, #tpu.memory_space<vmem>>, vector<1x16x16xf32>
    %8 = vector.shape_cast %7 : vector<1x16x16xf32> to vector<16x16xf32>
    %9 = arith.truncf %8 : vector<16x16xf32> to vector<16x16xbf16>
    %c0_6 = arith.constant 0 : index
    %c0_7 = arith.constant 0 : index
    %c0_8 = arith.constant 0 : index
    %10 = vector.load %arg3[%c0_6, %c0_7, %c0_8] : memref<2x16x128xbf16, #tpu.memory_space<vmem>>, vector<1x16x128xbf16>
    %11 = vector.shape_cast %10 : vector<1x16x128xbf16> to vector<16x128xbf16>
    %cst_9 = arith.constant dense<0.000000e+00> : vector<16x128xf32>
    %12 = tpu.matmul %9, %11, %cst_9 {dimension_numbers = #tpu.dot_dimension_numbers<[1], [0], [0], [1], [0, 0, 1, 1], [], []>} : vector<16x16xbf16>, vector<16x128xbf16>, vector<16x128xf32> -> vector<16x128xf32>
    %13 = vector.extract_strided_slice %12 {offsets = [0, 126], sizes = [16, 1], strides = [1, 1]} : vector<16x128xf32> to vector<16x1xf32>
    %14 = vector.extract_strided_slice %12 {offsets = [0, 127], sizes = [16, 1], strides = [1, 1]} : vector<16x128xf32> to vector<16x1xf32>
    %15 = tpu.transpose %13, [1, 0] : vector<16x1xf32> -> vector<1x16xf32>
    %16 = vector.broadcast %14 : vector<16x1xf32> to vector<16x16xf32>
    %17 = vector.broadcast %15 : vector<1x16xf32> to vector<16x16xf32>
    %18 = arith.addf %16, %17 : vector<16x16xf32>
    %cst_10 = arith.constant 2.000000e-01 : f32
    %19 = vector.broadcast %cst_10 : f32 to vector<16x16xf32>
    %20 = arith.mulf %19, %18 : vector<16x16xf32>
    %21 = arith.maximumf %18, %20 : vector<16x16xf32>
    %22 = arith.addf %21, %6 : vector<16x16xf32>
    %cst_11 = arith.constant dense<0xFF800000> : vector<16xf32>
    %23 = vector.multi_reduction <maximumf>, %22, %cst_11 [1] : vector<16x16xf32> to vector<16xf32>
    %24 = vector.shape_cast %23 : vector<16xf32> to vector<16x1xf32>
    %25 = vector.broadcast %24 : vector<16x1xf32> to vector<16x16xf32>
    %26 = arith.subf %22, %25 : vector<16x16xf32>
    %27 = math.exp %26 : vector<16x16xf32>
    %cst_12 = arith.constant dense<0.000000e+00> : vector<16xf32>
    %28 = vector.multi_reduction <add>, %27, %cst_12 [1] : vector<16x16xf32> to vector<16xf32>
    %29 = vector.shape_cast %28 : vector<16xf32> to vector<16x1xf32>
    %30 = tpu.reciprocal %29 {approx = true} : vector<16x1xf32> -> vector<16x1xf32>
    %31 = vector.broadcast %30 : vector<16x1xf32> to vector<16x16xf32>
    %32 = arith.mulf %27, %31 : vector<16x16xf32>
    %cst_13 = arith.constant dense<0.000000e+00> : vector<16x128xf32>
    %33 = tpu.matmul %32, %12, %cst_13 {dimension_numbers = #tpu.dot_dimension_numbers<[1], [0], [0], [1], [0, 0, 1, 1], [], []>} : vector<16x16xf32>, vector<16x128xf32>, vector<16x128xf32> -> vector<16x128xf32>
    %c0_14 = arith.constant 0 : index
    %c0_15 = arith.constant 0 : index
    %c0_16 = arith.constant 0 : index
    %34 = vector.load %arg4[%c0_14, %c0_15, %c0_16] : memref<2x1x128xf32, #tpu.memory_space<vmem>>, vector<1x1x128xf32>
    %35 = vector.shape_cast %34 : vector<1x1x128xf32> to vector<1x128xf32>
    %36 = vector.broadcast %35 : vector<1x128xf32> to vector<16x128xf32>
    %37 = arith.mulf %33, %36 : vector<16x128xf32>
    %c0_17 = arith.constant 0 : index
    %c0_18 = arith.constant 0 : index
    %c0_19 = arith.constant 0 : index
    %38 = vector.load %arg5[%c0_17, %c0_18, %c0_19] : memref<2x1x128xf32, #tpu.memory_space<vmem>>, vector<1x1x128xf32>
    %39 = vector.shape_cast %38 : vector<1x1x128xf32> to vector<1x128xf32>
    %40 = vector.broadcast %39 : vector<1x128xf32> to vector<16x128xf32>
    %41 = arith.addf %37, %40 : vector<16x128xf32>
    %cst_20 = arith.constant 0.000000e+00 : f32
    %42 = vector.broadcast %cst_20 : f32 to vector<16x128xf32>
    %43 = arith.maximumf %41, %42 : vector<16x128xf32>
    %c0_21 = arith.constant 0 : index
    %c0_22 = arith.constant 0 : index
    %c0_23 = arith.constant 0 : index
    %c0_24 = arith.constant 0 : index
    %44 = vector.load %arg6[%c0_21, %c0_22, %c0_23, %c0_24] : memref<1x2x16x128xf32, #tpu.memory_space<vmem>>, vector<1x1x16x128xf32>
    %45 = vector.shape_cast %44 : vector<1x1x16x128xf32> to vector<16x128xf32>
    %46 = vector.shape_cast %43 : vector<16x128xf32> to vector<1x1x16x128xf32>
    tpu.vector_store %arg6[%c0_21, %c0_22, %c0_23, %c0_24], %46 {strides = array<i32>} : memref<1x2x16x128xf32, #tpu.memory_space<vmem>>, vector<1x1x16x128xf32>,
    %47 = vector.extract_strided_slice %43 {offsets = [0, 0], sizes = [16, 16], strides = [1, 1]} : vector<16x128xf32> to vector<16x16xf32>
    %48 = arith.truncf %47 : vector<16x16xf32> to vector<16x16xbf16>
    %c1 = arith.constant 1 : index
    %c0_25 = arith.constant 0 : index
    %c0_26 = arith.constant 0 : index
    %49 = vector.load %arg3[%c1, %c0_25, %c0_26] : memref<2x16x128xbf16, #tpu.memory_space<vmem>>, vector<1x16x128xbf16>
    %50 = vector.shape_cast %49 : vector<1x16x128xbf16> to vector<16x128xbf16>
    %cst_27 = arith.constant dense<0.000000e+00> : vector<16x128xf32>
    %51 = tpu.matmul %48, %50, %cst_27 {dimension_numbers = #tpu.dot_dimension_numbers<[1], [0], [0], [1], [0, 0, 1, 1], [], []>} : vector<16x16xbf16>, vector<16x128xbf16>, vector<16x128xf32> -> vector<16x128xf32>
    %52 = vector.extract_strided_slice %51 {offsets = [0, 126], sizes = [16, 1], strides = [1, 1]} : vector<16x128xf32> to vector<16x1xf32>
    %53 = vector.extract_strided_slice %51 {offsets = [0, 127], sizes = [16, 1], strides = [1, 1]} : vector<16x128xf32> to vector<16x1xf32>
    %54 = tpu.transpose %52, [1, 0] : vector<16x1xf32> -> vector<1x16xf32>
    %55 = vector.broadcast %53 : vector<16x1xf32> to vector<16x16xf32>
    %56 = vector.broadcast %54 : vector<1x16xf32> to vector<16x16xf32>
    %57 = arith.addf %55, %56 : vector<16x16xf32>
    %cst_28 = arith.constant 2.000000e-01 : f32
    %58 = vector.broadcast %cst_28 : f32 to vector<16x16xf32>
    %59 = arith.mulf %58, %57 : vector<16x16xf32>
    %60 = arith.maximumf %57, %59 : vector<16x16xf32>
    %61 = arith.addf %60, %6 : vector<16x16xf32>
    %cst_29 = arith.constant dense<0xFF800000> : vector<16xf32>
    %62 = vector.multi_reduction <maximumf>, %61, %cst_29 [1] : vector<16x16xf32> to vector<16xf32>
    %63 = vector.shape_cast %62 : vector<16xf32> to vector<16x1xf32>
    %64 = vector.broadcast %63 : vector<16x1xf32> to vector<16x16xf32>
    %65 = arith.subf %61, %64 : vector<16x16xf32>
    %66 = math.exp %65 : vector<16x16xf32>
    %cst_30 = arith.constant dense<0.000000e+00> : vector<16xf32>
    %67 = vector.multi_reduction <add>, %66, %cst_30 [1] : vector<16x16xf32> to vector<16xf32>
    %68 = vector.shape_cast %67 : vector<16xf32> to vector<16x1xf32>
    %69 = tpu.reciprocal %68 {approx = true} : vector<16x1xf32> -> vector<16x1xf32>
    %70 = vector.broadcast %69 : vector<16x1xf32> to vector<16x16xf32>
    %71 = arith.mulf %66, %70 : vector<16x16xf32>
    %cst_31 = arith.constant dense<0.000000e+00> : vector<16x128xf32>
    %72 = tpu.matmul %71, %51, %cst_31 {dimension_numbers = #tpu.dot_dimension_numbers<[1], [0], [0], [1], [0, 0, 1, 1], [], []>} : vector<16x16xf32>, vector<16x128xf32>, vector<16x128xf32> -> vector<16x128xf32>
    %c1_32 = arith.constant 1 : index
    %c0_33 = arith.constant 0 : index
    %c0_34 = arith.constant 0 : index
    %73 = vector.load %arg4[%c1_32, %c0_33, %c0_34] : memref<2x1x128xf32, #tpu.memory_space<vmem>>, vector<1x1x128xf32>
    %74 = vector.shape_cast %73 : vector<1x1x128xf32> to vector<1x128xf32>
    %75 = vector.broadcast %74 : vector<1x128xf32> to vector<16x128xf32>
    %76 = arith.mulf %72, %75 : vector<16x128xf32>
    %c1_35 = arith.constant 1 : index
    %c0_36 = arith.constant 0 : index
    %c0_37 = arith.constant 0 : index
    %77 = vector.load %arg5[%c1_35, %c0_36, %c0_37] : memref<2x1x128xf32, #tpu.memory_space<vmem>>, vector<1x1x128xf32>
    %78 = vector.shape_cast %77 : vector<1x1x128xf32> to vector<1x128xf32>
    %79 = vector.broadcast %78 : vector<1x128xf32> to vector<16x128xf32>
    %80 = arith.addf %76, %79 : vector<16x128xf32>
    %cst_38 = arith.constant 0.000000e+00 : f32
    %81 = vector.broadcast %cst_38 : f32 to vector<16x128xf32>
    %82 = arith.maximumf %80, %81 : vector<16x128xf32>
    %c0_39 = arith.constant 0 : index
    %c1_40 = arith.constant 1 : index
    %c0_41 = arith.constant 0 : index
    %c0_42 = arith.constant 0 : index
    %83 = vector.load %arg6[%c0_39, %c1_40, %c0_41, %c0_42] : memref<1x2x16x128xf32, #tpu.memory_space<vmem>>, vector<1x1x16x128xf32>
    %84 = vector.shape_cast %83 : vector<1x1x16x128xf32> to vector<16x128xf32>
    %85 = vector.shape_cast %82 : vector<16x128xf32> to vector<1x1x16x128xf32>
    tpu.vector_store %arg6[%c0_39, %c1_40, %c0_41, %c0_42], %85 {strides = array<i32>} : memref<1x2x16x128xf32, #tpu.memory_space<vmem>>, vector<1x1x16x128xf32>,
    return
  }
  func.func @transform_0(%arg0: i32) -> (i32, i32, i32) {
    %c0_i32 = arith.constant 0 : i32
    %c0_i32_0 = arith.constant 0 : i32
    %c0_i32_1 = arith.constant 0 : i32
    return %arg0, %c0_i32, %c0_i32_0 : i32, i32, i32
  }
  func.func @transform_1(%arg0: i32) -> (i32, i32, i32) {
    %c0_i32 = arith.constant 0 : i32
    %c0_i32_0 = arith.constant 0 : i32
    %c0_i32_1 = arith.constant 0 : i32
    return %arg0, %c0_i32, %c0_i32_0 : i32, i32, i32
  }
  func.func @transform_2(%arg0: i32) -> (i32, i32, i32) {
    %c0_i32 = arith.constant 0 : i32
    %c0_i32_0 = arith.constant 0 : i32
    %c0_i32_1 = arith.constant 0 : i32
    %c0_i32_2 = arith.constant 0 : i32
    return %c0_i32, %c0_i32_0, %c0_i32_1 : i32, i32, i32
  }
  func.func @transform_3(%arg0: i32) -> (i32, i32, i32) {
    %c0_i32 = arith.constant 0 : i32
    %c0_i32_0 = arith.constant 0 : i32
    %c0_i32_1 = arith.constant 0 : i32
    %c0_i32_2 = arith.constant 0 : i32
    return %c0_i32, %c0_i32_0, %c0_i32_1 : i32, i32, i32
  }
  func.func @transform_4(%arg0: i32) -> (i32, i32, i32) {
    %c0_i32 = arith.constant 0 : i32
    %c0_i32_0 = arith.constant 0 : i32
    %c0_i32_1 = arith.constant 0 : i32
    %c0_i32_2 = arith.constant 0 : i32
    return %c0_i32, %c0_i32_0, %c0_i32_1 : i32, i32, i32
  }
  func.func @transform_5(%arg0: i32) -> (i32, i32, i32, i32) {
    %c0_i32 = arith.constant 0 : i32
    %c0_i32_0 = arith.constant 0 : i32
    %c0_i32_1 = arith.constant 0 : i32
    %c0_i32_2 = arith.constant 0 : i32
    return %arg0, %c0_i32, %c0_i32_0, %c0_i32_1 : i32, i32, i32, i32
  }
}

</mosaic_0001>

<llo_original>
// kernel: _run_fused.1
$region0: #{_run_fused.1}
  #allocation0 [shape = 'u32[]', space=smem, size = 0x4, offset = 0x4, fixed_abs, tag = 'smem constant byte address 0x4 - core index']
  #allocation1 [shape = 'u32[144,128]{1,0:T(1,128)}', space=vmem, size = 0x12000, scoped, tag = 'internal scratch']
  %s0 = inlined_call_operand.hbm [shape: f32[2,16,16], index: 0, kind: input, shape index: {}]
  %s1 = inlined_call_operand.hbm [shape: s8[2,16,16], index: 1, kind: input, shape index: {}]
  %s2 = inlined_call_operand.hbm [shape: bf16[2,16,128], index: 2, kind: input, shape index: {}]
  %s3 = inlined_call_operand.vmem [shape: f32[2,1,128], index: 3, kind: input, shape index: {}]
  %s4 = inlined_call_operand.vmem [shape: f32[2,1,128], index: 4, kind: input, shape index: {}]
  %s5 = inlined_call_operand.hbm [shape: f32[2,2,16,128], index: 5, kind: output, shape index: {}]
  %s6 = sld [smem:[#allocation0]]
  $region65: #{_run_fused.1} parent=0
    _
  %s8 = ssub.s32 1, %s6
  %s9 = scalar_select 0, %s8, %s6
  $region1: #{_run_fused.1} parent=0
    #allocation2 [shape = 'u8[16384]{0}', space=vmem, size = 0x4000, scoped, tag = 'input window, operand 0']
    #allocation3 [shape = 's32[2]{0}', space=sflag, size = 0x8, scoped, tag = 'scoped memory for _run_fused.1']
    #allocation4 [shape = 's32[2]{0}', space=sflag, size = 0x8, scoped, tag = 'scoped memory for _run_fused.1']
    #allocation5 [shape = 'u8[4096]{0}', space=vmem, size = 0x1000, scoped, tag = 'input window, operand 1']
    #allocation6 [shape = 's32[2]{0}', space=sflag, size = 0x8, scoped, tag = 'scoped memory for _run_fused.1']
    #allocation7 [shape = 'u8[8192]{0}', space=vmem, size = 0x2000, scoped, tag = 'input window, operand 2, single buffered']
    #allocation8 [shape = 'u8[32768]{0}', space=vmem, size = 0x8000, scoped, tag = 'output window, operand 0']
    %10 = vsyncpa [#allocation3], 0
    %s11 = scalar_lea.sflag [#allocation3], 1
    %12 = vsyncpa %s11, 0
    %13 = vsyncpa [#allocation6], 0
    %s14 = scalar_lea.sflag [#allocation6], 1
    %15 = vsyncpa %s14, 0
    %16 = vsyncpa [#allocation4], 0
    %s17 = scalar_lea.sflag [#allocation4], 1
    %18 = vsyncpa %s17, 0
    loop: start=0, step=1, limit=4
    $region2: #{_run_fused.1} parent=1 // loop_pre_header
      _
    $region3: #{_run_fused.1} parent=1 // loop_header
      %s20 = sphi 0, %s24
      %p21 = scmp.ge.s32.totalorder %s20, 4
      %s30 = sphi 0, %s32
      %s33 = sphi 0, %s30
      %s34 = sphi 0, %s33
      %s50 = sphi 0, %s34
      %s56 = sphi 0, %s58
      %s59 = sphi 0, %s56
      %s60 = sphi 0, %s59
      %s76 = sphi 0, %s60
      %s80 = sphi 0, %s80
      %s82 = sphi 0, %s80
      %s83 = sphi 0, %s82
      %s97 = sphi 0, %s83
      %s101 = sphi 0, %s101
      %s103 = sphi 0, %s101
      %s104 = sphi 0, %s103
      %s118 = sphi 0, %s104
      %s122 = sphi 0, %s122
      %s124 = sphi 0, %s122
      %s125 = sphi 0, %s124
      %s139 = sphi 0, %s125
      %s145 = sphi 0, %s147
      %s148 = sphi 0, %s145
      %s149 = sphi 0, %s148
      %s165 = sphi 0, %s149
    $region4: #{_run_fused.1} parent=1 // loop_header_branch
      %23 = sbr.rel (%p21) target = $region8
    $region5: #{_run_fused.1} parent=1 // loop_body
      %s25 = ssub.s32 %s20, 1
      %s26 = ssub.s32 %s20, 2
      %s27 = sadd.s32 %s20, 1
      %s28 = ssub.s32 %s20, %s27
      %p29 = scmp.eq.s32.totalorder %s28, 0
      %s31 = sadd.s32 %s30, 1
      %s32 = scalar_select %p29, %s30, %s31
      %p35 = pneg %p29
      %p36 = scmp.eq.s32.totalorder %s20, 1
      %p37 = por %p35, %p36
      %p38 = scmp.ne.s32.totalorder %s30, %s33
      %p39 = scmp.eq.s32.totalorder %s20, 0
      %p40 = por %p38, %p39
      %p41 = scmp.ne.s32.totalorder %s30, %s33
      %p42 = scmp.eq.s32.totalorder %s25, 1
      %p43 = por %p41, %p42
      %p44 = scmp.ne.s32.totalorder %s33, %s34
      %p45 = scmp.eq.s32.totalorder %s25, 0
      %p46 = por %p44, %p45
      %p47 = scmp.ne.s32.totalorder %s33, %s34
      %p48 = scmp.eq.s32.totalorder %s26, 1
      %p49 = por %p47, %p48
      %p51 = scmp.ne.s32.totalorder %s34, %s50
      %p52 = scmp.eq.s32.totalorder %s26, 0
      %p53 = por %p51, %p52
      %s54 = ssub.s32 %s20, %s27
      %p55 = scmp.eq.s32.totalorder %s54, 0
      %s57 = sadd.s32 %s56, 1
      %s58 = scalar_select %p55, %s56, %s57
      %p61 = pneg %p55
      %p62 = scmp.eq.s32.totalorder %s20, 1
      %p63 = por %p61, %p62
      %p64 = scmp.ne.s32.totalorder %s56, %s59
      %p65 = scmp.eq.s32.totalorder %s20, 0
      %p66 = por %p64, %p65
      %p67 = scmp.ne.s32.totalorder %s56, %s59
      %p68 = scmp.eq.s32.totalorder %s25, 1
      %p69 = por %p67, %p68
      %p70 = scmp.ne.s32.totalorder %s59, %s60
      %p71 = scmp.eq.s32.totalorder %s25, 0
      %p72 = por %p70, %p71
      %p73 = scmp.ne.s32.totalorder %s59, %s60
      %p74 = scmp.eq.s32.totalorder %s26, 1
      %p75 = por %p73, %p74
      %p77 = scmp.ne.s32.totalorder %s60, %s76
      %p78 = scmp.eq.s32.totalorder %s26, 0
      %p79 = por %p77, %p78
      %s81 = sadd.s32 %s80, 1
      %p84 = scmp.eq.s32.totalorder %s20, 1
      %p85 = scmp.ne.s32.totalorder %s80, %s82
      %p86 = scmp.eq.s32.totalorder %s20, 0
      %p87 = por %p85, %p86
      %p88 = scmp.ne.s32.totalorder %s80, %s82
      %p89 = scmp.eq.s32.totalorder %s25, 1
      %p90 = por %p88, %p89
      %p91 = scmp.ne.s32.totalorder %s82, %s83
      %p92 = scmp.eq.s32.totalorder %s25, 0
      %p93 = por %p91, %p92
      %p94 = scmp.ne.s32.totalorder %s82, %s83
      %p95 = scmp.eq.s32.totalorder %s26, 1
      %p96 = por %p94, %p95
      %p98 = scmp.ne.s32.totalorder %s83, %s97
      %p99 = scmp.eq.s32.totalorder %s26, 0
      %p100 = por %p98, %p99
      %s102 = sadd.s32 %s101, 1
      %p105 = scmp.eq.s32.totalorder %s20, 1
      %p106 = scmp.ne.s32.totalorder %s101, %s103
      %p107 = scmp.eq.s32.totalorder %s20, 0
      %p108 = por %p106, %p107
      %p109 = scmp.ne.s32.totalorder %s101, %s103
      %p110 = scmp.eq.s32.totalorder %s25, 1
      %p111 = por %p109, %p110
      %p112 = scmp.ne.s32.totalorder %s103, %s104
      %p113 = scmp.eq.s32.totalorder %s25, 0
      %p114 = por %p112, %p113
      %p115 = scmp.ne.s32.totalorder %s103, %s104
      %p116 = scmp.eq.s32.totalorder %s26, 1
      %p117 = por %p115, %p116
      %p119 = scmp.ne.s32.totalorder %s104, %s118
      %p120 = scmp.eq.s32.totalorder %s26, 0
      %p121 = por %p119, %p120
      %s123 = sadd.s32 %s122, 1
      %p126 = scmp.eq.s32.totalorder %s20, 1
      %p127 = scmp.ne.s32.totalorder %s122, %s124
      %p128 = scmp.eq.s32.totalorder %s20, 0
      %p129 = por %p127, %p128
      %p130 = scmp.ne.s32.totalorder %s122, %s124
      %p131 = scmp.eq.s32.totalorder %s25, 1
      %p132 = por %p130, %p131
      %p133 = scmp.ne.s32.totalorder %s124, %s125
      %p134 = scmp.eq.s32.totalorder %s25, 0
      %p135 = por %p133, %p134
      %p136 = scmp.ne.s32.totalorder %s124, %s125
      %p137 = scmp.eq.s32.totalorder %s26, 1
      %p138 = por %p136, %p137
      %p140 = scmp.ne.s32.totalorder %s125, %s139
      %p141 = scmp.eq.s32.totalorder %s26, 0
      %p142 = por %p140, %p141
      %s143 = ssub.s32 %s20, %s27
      %p144 = scmp.eq.s32.totalorder %s143, 0
      %s146 = sadd.s32 %s145, 1
      %s147 = scalar_select %p144, %s145, %s146
      %p150 = pneg %p144
      %p151 = scmp.eq.s32.totalorder %s20, 1
      %p152 = por %p150, %p151
      %p153 = scmp.ne.s32.totalorder %s145, %s148
      %p154 = scmp.eq.s32.totalorder %s20, 0
      %p155 = por %p153, %p154
      %p156 = scmp.ne.s32.totalorder %s145, %s148
      %p157 = scmp.eq.s32.totalorder %s25, 1
      %p158 = por %p156, %p157
      %p159 = scmp.ne.s32.totalorder %s148, %s149
      %p160 = scmp.eq.s32.totalorder %s25, 0
      %p161 = por %p159, %p160
      %p162 = scmp.ne.s32.totalorder %s148, %s149
      %p163 = scmp.eq.s32.totalorder %s26, 1
      %p164 = por %p162, %p163
      %p166 = scmp.ne.s32.totalorder %s149, %s165
      %p167 = scmp.eq.s32.totalorder %s26, 0
      %p168 = por %p166, %p167
      %p169 = scmp.le.s32.totalorder 1, %s20
      %p170 = scmp.lt.s32.totalorder %s20, 3
      %p171 = pnand %p169, %p170
      %p172 = pneg %p171
      // Predicated region
      $region9: #{_run_fused.1} parent=5 // pred_check
        _
      $region10: #{_run_fused.1} parent=5 // pred_check_branch
        %174 = sbr.rel (%p171) target = $region12
      $region11: #{_run_fused.1} parent=5 // pred_region
        %s175 = ssub.s32 %s20, 1
        // Predicated region
        $region13: #{_run_fused.1} parent=11 // pred_check
          %p176 = pneg %p93
        $region14: #{_run_fused.1} parent=11 // pred_check_branch
          %178 = sbr.rel (%p176) target = $region16
        $region15: #{_run_fused.1} parent=11 // pred_region
          %s180 = ssub.s32 256, 256
          %181 = vsyncadd [#allocation6], %s180
          %s182 = sshll.u32 [#allocation7], 4
          %s183 = int_to_ptr.vmem [resolvable:$true] %s182
          %188 = dma.hbm_to_vmem [thread:$0]  %s2, 256, %s183, [#allocation6], 64, 64, 4
        $region16: #{_run_fused.1} parent=11 // pred_fallthru
          _
        // Predicated region
        $region17: #{_run_fused.1} parent=11 // pred_check
          %p189 = pneg %p114
        $region18: #{_run_fused.1} parent=11 // pred_check_branch
          %191 = sbr.rel (%p189) target = $region20
        $region19: #{_run_fused.1} parent=11 // pred_region
          _
        $region20: #{_run_fused.1} parent=11 // pred_fallthru
          _
        // Predicated region
        $region21: #{_run_fused.1} parent=11 // pred_check
          %p192 = pneg %p135
        $region22: #{_run_fused.1} parent=11 // pred_check_branch
          %194 = sbr.rel (%p192) target = $region24
        $region23: #{_run_fused.1} parent=11 // pred_region
          _
        $region24: #{_run_fused.1} parent=11 // pred_fallthru
          _
      $region12: #{_run_fused.1} parent=5 // pred_fallthru
        _
      %p195 = scmp.lt.s32.totalorder %s20, 2
      // Predicated region
      $region25: #{_run_fused.1} parent=5 // pred_check
        %p196 = pneg %p195
      $region26: #{_run_fused.1} parent=5 // pred_check_branch
        %198 = sbr.rel (%p196) target = $region28
      $region27: #{_run_fused.1} parent=5 // pred_region
        // Predicated region
        $region29: #{_run_fused.1} parent=27 // pred_check
          %p199 = pneg %p40
        $region30: #{_run_fused.1} parent=27 // pred_check_branch
          %201 = sbr.rel (%p199) target = $region32
        $region31: #{_run_fused.1} parent=27 // pred_region
          %s202 = sand.u32 %s30, 1
          %s203 = scalar_lea.sflag [#allocation3], %s202
          %s204 = sand.u32 %s30, 1
          %s205 = smul.addr %s204, 16
          %s206 = scalar_lea.vmem [#allocation2], %s205
          %s208 = ssub.s32 256, 256
          %209 = vsyncadd %s203, %s208
          %s210 = smul.addr %s20, 2
          %s211 = smul.addr %s210, 128
          %s212 = scalar_lea.hbm %s0, %s211
          %s213 = sshll.u32 %s206, 4
          %s214 = int_to_ptr.vmem [resolvable:$true] %s213
          %219 = dma.hbm_to_vmem [thread:$0]  %s212, 256, %s214, %s203, 128, 128, 8
        $region32: #{_run_fused.1} parent=27 // pred_fallthru
          _
        // Predicated region
        $region33: #{_run_fused.1} parent=27 // pred_check
          %p220 = pneg %p66
        $region34: #{_run_fused.1} parent=27 // pred_check_branch
          %222 = sbr.rel (%p220) target = $region36
        $region35: #{_run_fused.1} parent=27 // pred_region
          %s223 = sand.u32 %s20, 1
          %s224 = scalar_lea.sflag [#allocation6], %s223
          %s225 = sand.u32 %s56, 1
          %s226 = smul.addr %s225, 4
          %s227 = scalar_lea.vmem [#allocation5], %s226
          %s229 = ssub.s32 64, 64
          %230 = vsyncadd %s224, %s229
          %s231 = smul.addr %s20, 2
          %s232 = smul.addr %s231, 32
          %s233 = scalar_lea.hbm %s1, %s232
          %s234 = sshll.u32 %s227, 4
          %s235 = int_to_ptr.vmem [resolvable:$true] %s234
          %240 = dma.hbm_to_vmem [thread:$0]  %s233, 64, %s235, %s224, 32, 32, 2
        $region36: #{_run_fused.1} parent=27 // pred_fallthru
          _
      $region28: #{_run_fused.1} parent=5 // pred_fallthru
        _
      %p241 = scmp.le.s32.totalorder 1, %s20
      %p242 = scmp.lt.s32.totalorder %s20, 3
      %p243 = pnand %p241, %p242
      %p244 = pneg %p243
      // Predicated region
      $region37: #{_run_fused.1} parent=5 // pred_check
        _
      $region38: #{_run_fused.1} parent=5 // pred_check_branch
        %246 = sbr.rel (%p243) target = $region40
      $region39: #{_run_fused.1} parent=5 // pred_region
        %s247 = ssub.s32 %s20, 1
        %s248 = sand.u32 %s33, 1
        %s249 = scalar_lea.sflag [#allocation3], %s248
        %s250 = sand.u32 %s33, 1
        %s251 = smul.addr %s250, 16
        %s252 = scalar_lea.vmem [#allocation2], %s251
        // Predicated region
        $region41: #{_run_fused.1} parent=39 // pred_check
          %p253 = pneg %p46
        $region42: #{_run_fused.1} parent=39 // pred_check_branch
          %255 = sbr.rel (%p253) target = $region44
        $region43: #{_run_fused.1} parent=39 // pred_region
          %256 = dma.done %s249, 256
        $region44: #{_run_fused.1} parent=39 // pred_fallthru
          _
        %s257 = sand.u32 %s25, 1
        %s258 = scalar_lea.sflag [#allocation6], %s257
        %s259 = sand.u32 %s59, 1
        %s260 = smul.addr %s259, 4
        %s261 = scalar_lea.vmem [#allocation5], %s260
        // Predicated region
        $region45: #{_run_fused.1} parent=39 // pred_check
          %p262 = pneg %p72
        $region46: #{_run_fused.1} parent=39 // pred_check_branch
          %264 = sbr.rel (%p262) target = $region48
        $region47: #{_run_fused.1} parent=39 // pred_region
          %265 = dma.done %s258, 64
        $region48: #{_run_fused.1} parent=39 // pred_fallthru
          _
        // Predicated region
        $region49: #{_run_fused.1} parent=39 // pred_check
          %p266 = pneg %p93
        $region50: #{_run_fused.1} parent=39 // pred_check_branch
          %268 = sbr.rel (%p266) target = $region52
        $region51: #{_run_fused.1} parent=39 // pred_region
          %269 = dma.done [#allocation6], 256
        $region52: #{_run_fused.1} parent=39 // pred_fallthru
          _
        %s270 = sand.u32 %s33, 1
        %s271 = scalar_lea.sflag [#allocation3], %s270
        %s272 = sand.u32 %s33, 1
        %s273 = smul.addr %s272, 16
        %s274 = scalar_lea.vmem [#allocation2], %s273
        %p275 = pneg %p46
        %p276 = pneg %p43
        %s277 = sand.u32 %s25, 1
        %s278 = scalar_lea.sflag [#allocation6], %s277
        %s279 = sand.u32 %s59, 1
        %s280 = smul.addr %s279, 4
        %s281 = scalar_lea.vmem [#allocation5], %s280
        %p282 = pneg %p72
        %p283 = pneg %p69
        %p284 = pneg %p93
        %p285 = pneg %p90
        %p286 = pneg %p114
        %p287 = pneg %p111
        %p288 = pneg %p135
        %p289 = pneg %p132
        %p290 = pneg %p161
        %p291 = pneg %p158
        %s292 = sand.u32 %s148, 1
        %s293 = scalar_lea.sflag [#allocation4], %s292
        %s294 = sand.u32 %s148, 1
        %s295 = smul.addr %s294, 32
        %s296 = scalar_lea.vmem [#allocation8], %s295
        %v298 = vld [vmem:[%s261] sm:$0x3]
        %v299 = vld [vmem:[%s261 + $0x2] sm:$0x3]
        %v300 = vunpack.c.0.s8 %v298
        %v301 = vunpack.c.0.s8 %v299
        %v302 = vcvt.s32.f32 %v300
        %v303 = vcvt.s32.f32 %v301
        %v304 = vsub.f32 %v302, 1.0
        %v305 = vsub.f32 %v303, 1.0
        %v306 = vmul.f32 %v304, 1e+09
        %v307 = vmul.f32 %v305, 1e+09
        %v308 = vld [vmem:[%s252] sm:$0xff]
        %v309 = vld [vmem:[%s252 + $0x8] sm:$0xff]
        %v310 = vpack.c.bf16 %v309, %v308
        %v311 = vld [vmem:[#allocation7] sm:$0xf]
        %v312 = vld [vmem:[#allocation7 + $0x4] sm:$0xf]
        %v315 = vunpack.c.l.b16 %v311
        %v316 = vunpack.c.l.b16 %v312
        %v317 = vpack.c.b16 %v316, %v315
        %vm319 = vcmask 130048
        %v321 = vsel %vm319, %v310, 0
        %323 = vmatprep.subr.bf16.mxu0 0
        %324 = vmatpush1.bf16.msra.mxu0 %v317
        %325 = vmatprep.subr.bf16.mxu0 0
        %326 = vmatpush1.bf16.msra.mxu0 0
        %327 = vmatprep.subr.bf16.mxu0 0
        %328 = vmatpush1.bf16.msra.mxu0 0
        %329 = vmatprep.subr.bf16.mxu0 0
        %330 = vmatpush1.bf16.msra.mxu0 0
        %331 = vmatprep.subr.bf16.mxu0 0
        %332 = vmatpush1.bf16.msra.mxu0 0
        %333 = vmatprep.subr.bf16.mxu0 0
        %334 = vmatpush1.bf16.msra.mxu0 0
        %335 = vmatprep.subr.bf16.mxu0 0
        %336 = vmatpush1.bf16.msra.mxu0 0
        %337 = vmatprep.subr.bf16.mxu0 0
        %338 = vmatpush1.bf16.msra.mxu0 0
        %339 = vmatprep.subr.bf16.mxu0 0
        %340 = vmatpush1.bf16.msra.mxu0 0
        %341 = vmatprep.subr.bf16.mxu0 0
        %342 = vmatpush1.bf16.msra.mxu0 0
        %343 = vmatprep.subr.bf16.mxu0 0
        %344 = vmatpush1.bf16.msra.mxu0 0
        %345 = vmatprep.subr.bf16.mxu0 0
        %346 = vmatpush1.bf16.msra.mxu0 0
        %347 = vmatprep.subr.bf16.mxu0 0
        %348 = vmatpush1.bf16.msra.mxu0 0
        %349 = vmatprep.subr.bf16.mxu0 0
        %350 = vmatpush1.bf16.msra.mxu0 0
        %351 = vmatprep.subr.bf16.mxu0 0
        %352 = vmatpush1.bf16.msra.mxu0 0
        %353 = vmatprep.subr.bf16.mxu0 0
        %354 = vmatpush1.bf16.msra.mxu0 0
        %355 = vmatprep.mubr.bf16.mxu0 0
        %356 = vmatmul.mubr.bf16.gmra.mrb[0].mxu0 %v321
        %v357 = vpop.f32.mrb[0].mxu0
        %v358 = vadd.f32 0.0, %v357
        %v359 = vpop.f32.mrb[0].mxu0
        %v360 = vpop.f32.mrb[0].mxu0
        %v361 = vadd.f32 0.0, %v360
        %v362 = vpop.f32.mrb[0].mxu0
        %363 = vdwg.mxu0
        %366 = vrot.lane.b32.xlu0 %v358, 2
        %v367 = vpop.permute.xlu0 %366
        %368 = vrot.lane.b32.xlu0 %v361, 2
        %v369 = vpop.permute.xlu0 %368
        %372 = vxpose.xlu0.b32.start [1/16] %v367, 128
        %373 = vxpose.xlu0.b32.cont [2/16] %v369, 128
        %374 = vxpose.xlu0.b32.cont [3/16] 0.0, 128
        %375 = vxpose.xlu0.b32.cont [4/16] 0.0, 128
        %376 = vxpose.xlu0.b32.cont [5/16] 0.0, 128
        %377 = vxpose.xlu0.b32.cont [6/16] 0.0, 128
        %378 = vxpose.xlu0.b32.cont [7/16] 0.0, 128
        %379 = vxpose.xlu0.b32.cont [8/16] 0.0, 128
        %380 = vxpose.xlu0.b32.cont [9/16] 0.0, 128
        %381 = vxpose.xlu0.b32.cont [10/16] 0.0, 128
        %382 = vxpose.xlu0.b32.cont [11/16] 0.0, 128
        %383 = vxpose.xlu0.b32.cont [12/16] 0.0, 128
        %384 = vxpose.xlu0.b32.cont [13/16] 0.0, 128
        %385 = vxpose.xlu0.b32.cont [14/16] 0.0, 128
        %386 = vxpose.xlu0.b32.cont [15/16] 0.0, 128
        %387 = vxpose.xlu0.b32.end [16/16] 0.0, 128
        %v388 = vpop.trf.xlu0
        %v389 = vpop.trf.xlu0
        %v390 = vpop.trf.xlu0
        %v391 = vpop.trf.xlu0
        %v392 = vpop.trf.xlu0
        %v393 = vpop.trf.xlu0
        %v394 = vpop.trf.xlu0
        %v395 = vpop.trf.xlu0
        %v396 = vpop.trf.xlu0
        %v397 = vpop.trf.xlu0
        %v398 = vpop.trf.xlu0
        %v399 = vpop.trf.xlu0
        %v400 = vpop.trf.xlu0
        %v401 = vpop.trf.xlu0
        %v402 = vpop.trf.xlu0
        %v403 = vpop.trf.xlu0
        %404 = vset.pattern.permute.xlu0 127
        %405 = vperm.xlu0 %404, %v358
        %v406 = vpop.permute.xlu0 %405
        %408 = vset.pattern.permute.xlu0 127
        %409 = vperm.xlu0 %408, %v361
        %v410 = vpop.permute.xlu0 %409
        %v412 = vlaneseq
        %v413 = vshrl.u32 %v412, 7
        %v414 = vsub.s32 0, %v413
        %v415 = vrot.slane %v388, %v414
        %v416 = vadd.f32 %v406, %v415
        %v417 = vadd.f32 %v410, %v415
        %v418 = vmul.f32 %v416, 0.2
        %v419 = vmul.f32 %v417, 0.2
        %v420 = vmax.f32 %v416, %v418
        %v421 = vmax.f32 %v417, %v419
        %v422 = vadd.f32 %v420, %v306
        %v423 = vadd.f32 %v421, %v307
        %v424 = vsel %vm319, %v422, -inf
        %425 = vmax.xlane.f32.xlu0 %v424
        %v426 = vpop.xlane.xlu0 %425
        %v427 = vsel %vm319, %v423, -inf
        %428 = vmax.xlane.f32.xlu0 %v427
        %v429 = vpop.xlane.xlu0 %428
        %v430 = vsub.f32 %v422, %v426
        %v431 = vsub.f32 %v423, %v429
        %v432 = vmul.f32 %v430, 1.442695
        %v433 = vpow.pop %v432
        %v434 = vmul.f32 %v431, 1.442695
        %v435 = vpow.pop %v434
        %v436 = vsel %vm319, %v433, 0.0
        %437 = vadd.xlane.f32.xlu0 %v436
        %v438 = vpop.xlane.xlu0 %437
        %v439 = vsel %vm319, %v435, 0.0
        %440 = vadd.xlane.f32.xlu0 %v439
        %v441 = vpop.xlane.xlu0 %440
        %v442 = vrcp.pop %v438
        %v443 = vrcp.pop %v441
        %v444 = vmul.f32 %v433, %v442
        %v445 = vmul.f32 %v435, %v443
        %v447 = vsel %vm319, %v444, 0
        %v450 = vsel %vm319, %v445, 0
        %452 = vmatprep.subr.mxu0 0.0
        %453 = vmatpush1.msra.mxu0 %v358
        %454 = vmatprep.subr.mxu0 0.0
        %455 = vmatpush1.msra.mxu0 %v361
        %456 = vmatprep.subr.mxu0 0.0
        %457 = vmatpush1.msra.mxu0 0.0
        %458 = vmatprep.subr.mxu0 0.0
        %459 = vmatpush1.msra.mxu0 0.0
        %460 = vmatprep.subr.mxu0 0.0
        %461 = vmatpush1.msra.mxu0 0.0
        %462 = vmatprep.subr.mxu0 0.0
        %463 = vmatpush1.msra.mxu0 0.0
        %464 = vmatprep.subr.mxu0 0.0
        %465 = vmatpush1.msra.mxu0 0.0
        %466 = vmatprep.subr.mxu0 0.0
        %467 = vmatpush1.msra.mxu0 0.0
        %468 = vmatprep.subr.mxu0 0.0
        %469 = vmatpush1.msra.mxu0 0.0
        %470 = vmatprep.subr.mxu0 0.0
        %471 = vmatpush1.msra.mxu0 0.0
        %472 = vmatprep.subr.mxu0 0.0
        %473 = vmatpush1.msra.mxu0 0.0
        %474 = vmatprep.subr.mxu0 0.0
        %475 = vmatpush1.msra.mxu0 0.0
        %476 = vmatprep.subr.mxu0 0.0
        %477 = vmatpush1.msra.mxu0 0.0
        %478 = vmatprep.subr.mxu0 0.0
        %479 = vmatpush1.msra.mxu0 0.0
        %480 = vmatprep.subr.mxu0 0.0
        %481 = vmatpush1.msra.mxu0 0.0
        %482 = vmatprep.subr.mxu0 0.0
        %483 = vmatpush1.msra.mxu0 0.0
        %484 = vmatprep.subr.mxu0 0.0
        %485 = vmatpush1.msra.mxu0 0.0
        %486 = vmatprep.subr.mxu0 0.0
        %487 = vmatpush1.msra.mxu0 0.0
        %488 = vmatprep.subr.mxu0 0.0
        %489 = vmatpush1.msra.mxu0 0.0
        %490 = vmatprep.subr.mxu0 0.0
        %491 = vmatpush1.msra.mxu0 0.0
        %492 = vmatprep.subr.mxu0 0.0
        %493 = vmatpush1.msra.mxu0 0.0
        %494 = vmatprep.subr.mxu0 0.0
        %495 = vmatpush1.msra.mxu0 0.0
        %496 = vmatprep.subr.mxu0 0.0
        %497 = vmatpush1.msra.mxu0 0.0
        %498 = vmatprep.subr.mxu0 0.0
        %499 = vmatpush1.msra.mxu0 0.0
        %500 = vmatprep.subr.mxu0 0.0
        %501 = vmatpush1.msra.mxu0 0.0
        %502 = vmatprep.subr.mxu0 0.0
        %503 = vmatpush1.msra.mxu0 0.0
        %504 = vmatprep.subr.mxu0 0.0
        %505 = vmatpush1.msra.mxu0 0.0
        %506 = vmatprep.subr.mxu0 0.0
        %507 = vmatpush1.msra.mxu0 0.0
        %508 = vmatprep.subr.mxu0 0.0
        %509 = vmatpush1.msra.mxu0 0.0
        %510 = vmatprep.subr.mxu0 0.0
        %511 = vmatpush1.msra.mxu0 0.0
        %512 = vmatprep.subr.mxu0 0.0
        %513 = vmatpush1.msra.mxu0 0.0
        %514 = vmatprep.subr.mxu0 0.0
        %515 = vmatpush1.msra.mxu0 0.0
        %516 = vmatprep.mubr.f32.mxu0 0.0
        %517 = vmatmul.mubr.f32.gmra.mrb[0].mxu0 %v447
        %v518 = vpop.f32.mrb[0].mxu0
        %v519 = vadd.f32 0.0, %v518
        %v520 = vpop.f32.mrb[0].mxu0
        %521 = vmatprep.mubr.f32.mxu0 0.0
        %522 = vmatmul.mubr.f32.gmra.mrb[0].mxu0 %v450
        %v523 = vpop.f32.mrb[0].mxu0
        %v524 = vadd.f32 0.0, %v523
        %v525 = vpop.f32.mrb[0].mxu0
        %526 = vdwg.mxu0
        %v527 = vld [vmem:[%s3] sm:$0x1]
        %v529 = vlaneseq
        %v530 = vshrl.u32 %v529, 7
        %v531 = vsub.s32 0, %v530
        %v532 = vrot.slane %v527, %v531
        %v534 = vmul.f32 %v519, %v532
        %v535 = vmul.f32 %v524, %v532
        %v536 = vld [vmem:[%s4] sm:$0x1]
        %v538 = vlaneseq
        %v539 = vshrl.u32 %v538, 7
        %v540 = vsub.s32 0, %v539
        %v541 = vrot.slane %v536, %v540
        %v543 = vadd.f32 %v534, %v541
        %v544 = vadd.f32 %v535, %v541
        %v545 = vmax.f32 %v543, 0.0
        %v546 = vmax.f32 %v544, 0.0
        %547 = vst [vmem:[%s296] sm:$0xff] %v545
        %548 = vst [vmem:[%s296 + $0x8] sm:$0xff] %v546
        %v549 = vpack.c.bf16 %v546, %v545
        %s550 = scalar_lea.vmem [#allocation7], 8
        %v551 = vld [vmem:[%s550] sm:$0xf]
        %v552 = vld [vmem:[%s550 + $0x4] sm:$0xf]
        %v555 = vunpack.c.l.b16 %v551
        %v556 = vunpack.c.l.b16 %v552
        %v557 = vpack.c.b16 %v556, %v555
        %v560 = vsel %vm319, %v549, 0
        %562 = vmatprep.subr.bf16.mxu0 0
        %563 = vmatpush1.bf16.msra.mxu0 %v557
        %564 = vmatprep.subr.bf16.mxu0 0
        %565 = vmatpush1.bf16.msra.mxu0 0
        %566 = vmatprep.subr.bf16.mxu0 0
        %567 = vmatpush1.bf16.msra.mxu0 0
        %568 = vmatprep.subr.bf16.mxu0 0
        %569 = vmatpush1.bf16.msra.mxu0 0
        %570 = vmatprep.subr.bf16.mxu0 0
        %571 = vmatpush1.bf16.msra.mxu0 0
        %572 = vmatprep.subr.bf16.mxu0 0
        %573 = vmatpush1.bf16.msra.mxu0 0
        %574 = vmatprep.subr.bf16.mxu0 0
        %575 = vmatpush1.bf16.msra.mxu0 0
        %576 = vmatprep.subr.bf16.mxu0 0
        %577 = vmatpush1.bf16.msra.mxu0 0
        %578 = vmatprep.subr.bf16.mxu0 0
        %579 = vmatpush1.bf16.msra.mxu0 0
        %580 = vmatprep.subr.bf16.mxu0 0
        %581 = vmatpush1.bf16.msra.mxu0 0
        %582 = vmatprep.subr.bf16.mxu0 0
        %583 = vmatpush1.bf16.msra.mxu0 0
        %584 = vmatprep.subr.bf16.mxu0 0
        %585 = vmatpush1.bf16.msra.mxu0 0
        %586 = vmatprep.subr.bf16.mxu0 0
        %587 = vmatpush1.bf16.msra.mxu0 0
        %588 = vmatprep.subr.bf16.mxu0 0
        %589 = vmatpush1.bf16.msra.mxu0 0
        %590 = vmatprep.subr.bf16.mxu0 0
        %591 = vmatpush1.bf16.msra.mxu0 0
        %592 = vmatprep.subr.bf16.mxu0 0
        %593 = vmatpush1.bf16.msra.mxu0 0
        %594 = vmatprep.mubr.bf16.mxu0 0
        %595 = vmatmul.mubr.bf16.gmra.mrb[0].mxu0 %v560
        %v596 = vpop.f32.mrb[0].mxu0
        %v597 = vadd.f32 0.0, %v596
        %v598 = vpop.f32.mrb[0].mxu0
        %v599 = vpop.f32.mrb[0].mxu0
        %v600 = vadd.f32 0.0, %v599
        %v601 = vpop.f32.mrb[0].mxu0
        %602 = vdwg.mxu0
        %605 = vrot.lane.b32.xlu0 %v597, 2
        %v606 = vpop.permute.xlu0 %605
        %607 = vrot.lane.b32.xlu0 %v600, 2
        %v608 = vpop.permute.xlu0 %607
        %611 = vxpose.xlu0.b32.start [1/16] %v606, 128
        %612 = vxpose.xlu0.b32.cont [2/16] %v608, 128
        %613 = vxpose.xlu0.b32.cont [3/16] 0.0, 128
        %614 = vxpose.xlu0.b32.cont [4/16] 0.0, 128
        %615 = vxpose.xlu0.b32.cont [5/16] 0.0, 128
        %616 = vxpose.xlu0.b32.cont [6/16] 0.0, 128
        %617 = vxpose.xlu0.b32.cont [7/16] 0.0, 128
        %618 = vxpose.xlu0.b32.cont [8/16] 0.0, 128
        %619 = vxpose.xlu0.b32.cont [9/16] 0.0, 128
        %620 = vxpose.xlu0.b32.cont [10/16] 0.0, 128
        %621 = vxpose.xlu0.b32.cont [11/16] 0.0, 128
        %622 = vxpose.xlu0.b32.cont [12/16] 0.0, 128
        %623 = vxpose.xlu0.b32.cont [13/16] 0.0, 128
        %624 = vxpose.xlu0.b32.cont [14/16] 0.0, 128
        %625 = vxpose.xlu0.b32.cont [15/16] 0.0, 128
        %626 = vxpose.xlu0.b32.end [16/16] 0.0, 128
        %v627 = vpop.trf.xlu0
        %v628 = vpop.trf.xlu0
        %v629 = vpop.trf.xlu0
        %v630 = vpop.trf.xlu0
        %v631 = vpop.trf.xlu0
        %v632 = vpop.trf.xlu0
        %v633 = vpop.trf.xlu0
        %v634 = vpop.trf.xlu0
        %v635 = vpop.trf.xlu0
        %v636 = vpop.trf.xlu0
        %v637 = vpop.trf.xlu0
        %v638 = vpop.trf.xlu0
        %v639 = vpop.trf.xlu0
        %v640 = vpop.trf.xlu0
        %v641 = vpop.trf.xlu0
        %v642 = vpop.trf.xlu0
        %643 = vset.pattern.permute.xlu0 127
        %644 = vperm.xlu0 %643, %v597
        %v645 = vpop.permute.xlu0 %644
        %647 = vset.pattern.permute.xlu0 127
        %648 = vperm.xlu0 %647, %v600
        %v649 = vpop.permute.xlu0 %648
        %v651 = vlaneseq
        %v652 = vshrl.u32 %v651, 7
        %v653 = vsub.s32 0, %v652
        %v654 = vrot.slane %v627, %v653
        %v655 = vadd.f32 %v645, %v654
        %v656 = vadd.f32 %v649, %v654
        %v657 = vmul.f32 %v655, 0.2
        %v658 = vmul.f32 %v656, 0.2
        %v659 = vmax.f32 %v655, %v657
        %v660 = vmax.f32 %v656, %v658
        %v661 = vadd.f32 %v659, %v306
        %v662 = vadd.f32 %v660, %v307
        %v663 = vsel %vm319, %v661, -inf
        %664 = vmax.xlane.f32.xlu0 %v663
        %v665 = vpop.xlane.xlu0 %664
        %v666 = vsel %vm319, %v662, -inf
        %667 = vmax.xlane.f32.xlu0 %v666
        %v668 = vpop.xlane.xlu0 %667
        %v669 = vsub.f32 %v661, %v665
        %v670 = vsub.f32 %v662, %v668
        %v671 = vmul.f32 %v669, 1.442695
        %v672 = vpow.pop %v671
        %v673 = vmul.f32 %v670, 1.442695
        %v674 = vpow.pop %v673
        %v675 = vsel %vm319, %v672, 0.0
        %676 = vadd.xlane.f32.xlu0 %v675
        %v677 = vpop.xlane.xlu0 %676
        %v678 = vsel %vm319, %v674, 0.0
        %679 = vadd.xlane.f32.xlu0 %v678
        %v680 = vpop.xlane.xlu0 %679
        %v681 = vrcp.pop %v677
        %v682 = vrcp.pop %v680
        %v683 = vmul.f32 %v672, %v681
        %v684 = vmul.f32 %v674, %v682
        %v686 = vsel %vm319, %v683, 0
        %v689 = vsel %vm319, %v684, 0
        %691 = vmatprep.subr.mxu0 0.0
        %692 = vmatpush1.msra.mxu0 %v597
        %693 = vmatprep.subr.mxu0 0.0
        %694 = vmatpush1.msra.mxu0 %v600
        %695 = vmatprep.subr.mxu0 0.0
        %696 = vmatpush1.msra.mxu0 0.0
        %697 = vmatprep.subr.mxu0 0.0
        %698 = vmatpush1.msra.mxu0 0.0
        %699 = vmatprep.subr.mxu0 0.0
        %700 = vmatpush1.msra.mxu0 0.0
        %701 = vmatprep.subr.mxu0 0.0
        %702 = vmatpush1.msra.mxu0 0.0
        %703 = vmatprep.subr.mxu0 0.0
        %704 = vmatpush1.msra.mxu0 0.0
        %705 = vmatprep.subr.mxu0 0.0
        %706 = vmatpush1.msra.mxu0 0.0
        %707 = vmatprep.subr.mxu0 0.0
        %708 = vmatpush1.msra.mxu0 0.0
        %709 = vmatprep.subr.mxu0 0.0
        %710 = vmatpush1.msra.mxu0 0.0
        %711 = vmatprep.subr.mxu0 0.0
        %712 = vmatpush1.msra.mxu0 0.0
        %713 = vmatprep.subr.mxu0 0.0
        %714 = vmatpush1.msra.mxu0 0.0
        %715 = vmatprep.subr.mxu0 0.0
        %716 = vmatpush1.msra.mxu0 0.0
        %717 = vmatprep.subr.mxu0 0.0
        %718 = vmatpush1.msra.mxu0 0.0
        %719 = vmatprep.subr.mxu0 0.0
        %720 = vmatpush1.msra.mxu0 0.0
        %721 = vmatprep.subr.mxu0 0.0
        %722 = vmatpush1.msra.mxu0 0.0
        %723 = vmatprep.subr.mxu0 0.0
        %724 = vmatpush1.msra.mxu0 0.0
        %725 = vmatprep.subr.mxu0 0.0
        %726 = vmatpush1.msra.mxu0 0.0
        %727 = vmatprep.subr.mxu0 0.0
        %728 = vmatpush1.msra.mxu0 0.0
        %729 = vmatprep.subr.mxu0 0.0
        %730 = vmatpush1.msra.mxu0 0.0
        %731 = vmatprep.subr.mxu0 0.0
        %732 = vmatpush1.msra.mxu0 0.0
        %733 = vmatprep.subr.mxu0 0.0
        %734 = vmatpush1.msra.mxu0 0.0
        %735 = vmatprep.subr.mxu0 0.0
        %736 = vmatpush1.msra.mxu0 0.0
        %737 = vmatprep.subr.mxu0 0.0
        %738 = vmatpush1.msra.mxu0 0.0
        %739 = vmatprep.subr.mxu0 0.0
        %740 = vmatpush1.msra.mxu0 0.0
        %741 = vmatprep.subr.mxu0 0.0
        %742 = vmatpush1.msra.mxu0 0.0
        %743 = vmatprep.subr.mxu0 0.0
        %744 = vmatpush1.msra.mxu0 0.0
        %745 = vmatprep.subr.mxu0 0.0
        %746 = vmatpush1.msra.mxu0 0.0
        %747 = vmatprep.subr.mxu0 0.0
        %748 = vmatpush1.msra.mxu0 0.0
        %749 = vmatprep.subr.mxu0 0.0
        %750 = vmatpush1.msra.mxu0 0.0
        %751 = vmatprep.subr.mxu0 0.0
        %752 = vmatpush1.msra.mxu0 0.0
        %753 = vmatprep.subr.mxu0 0.0
        %754 = vmatpush1.msra.mxu0 0.0
        %755 = vmatprep.mubr.f32.mxu0 0.0
        %756 = vmatmul.mubr.f32.gmra.mrb[0].mxu0 %v686
        %v757 = vpop.f32.mrb[0].mxu0
        %v758 = vadd.f32 0.0, %v757
        %v759 = vpop.f32.mrb[0].mxu0
        %760 = vmatprep.mubr.f32.mxu0 0.0
        %761 = vmatmul.mubr.f32.gmra.mrb[0].mxu0 %v689
        %v762 = vpop.f32.mrb[0].mxu0
        %v763 = vadd.f32 0.0, %v762
        %v764 = vpop.f32.mrb[0].mxu0
        %765 = vdwg.mxu0
        %s766 = scalar_lea.vmem %s3, 1
        %v767 = vld [vmem:[%s766] sm:$0x1]
        %v769 = vlaneseq
        %v770 = vshrl.u32 %v769, 7
        %v771 = vsub.s32 0, %v770
        %v772 = vrot.slane %v767, %v771
        %v774 = vmul.f32 %v758, %v772
        %v775 = vmul.f32 %v763, %v772
        %s776 = scalar_lea.vmem %s4, 1
        %v777 = vld [vmem:[%s776] sm:$0x1]
        %v779 = vlaneseq
        %v780 = vshrl.u32 %v779, 7
        %v781 = vsub.s32 0, %v780
        %v782 = vrot.slane %v777, %v781
        %v784 = vadd.f32 %v774, %v782
        %v785 = vadd.f32 %v775, %v782
        %v786 = vmax.f32 %v784, 0.0
        %v787 = vmax.f32 %v785, 0.0
        %s788 = scalar_lea.vmem %s296, 16 [#allocation8]
        %789 = vst [vmem:[%s788] sm:$0xff] %v786
        %790 = vst [vmem:[%s788 + $0x8] sm:$0xff] %v787
        %s791 = sand.u32 %s148, 1
        %s792 = scalar_lea.sflag [#allocation4], %s791
        %s793 = sand.u32 %s148, 1
        %s794 = smul.addr %s793, 32
        %s795 = scalar_lea.vmem [#allocation8], %s794
        // Predicated region
        $region53: #{_run_fused.1} parent=39 // pred_check
          %p796 = pneg %p158
        $region54: #{_run_fused.1} parent=39 // pred_check_branch
          %798 = sbr.rel (%p796) target = $region56
        $region55: #{_run_fused.1} parent=39 // pred_region
          %s800 = ssub.s32 512, 512
          %801 = vsyncadd %s792, %s800
          %s802 = smul.addr %s25, 4
          %s803 = smul.addr %s802, 128
          %s804 = scalar_lea.hbm %s5, %s803
          %s805 = sshll.u32 %s795, 4
          %s806 = int_to_ptr.vmem [resolvable:$true] %s805
          %811 = dma.vmem_to_hbm [thread:$0]  %s806, 512, %s804, %s792, 128, 128, 8
        $region56: #{_run_fused.1} parent=39 // pred_fallthru
          _
      $region40: #{_run_fused.1} parent=5 // pred_fallthru
        _
      %p812 = scmp.le.s32.totalorder 2, %s20
      // Predicated region
      $region57: #{_run_fused.1} parent=5 // pred_check
        %p813 = pneg %p812
      $region58: #{_run_fused.1} parent=5 // pred_check_branch
        %815 = sbr.rel (%p813) target = $region60
      $region59: #{_run_fused.1} parent=5 // pred_region
        %s816 = ssub.s32 %s20, 2
        // Predicated region
        $region61: #{_run_fused.1} parent=59 // pred_check
          %p817 = pneg %p164
        $region62: #{_run_fused.1} parent=59 // pred_check_branch
          %819 = sbr.rel (%p817) target = $region64
        $region63: #{_run_fused.1} parent=59 // pred_region
          %s820 = sand.u32 %s149, 1
          %s821 = scalar_lea.sflag [#allocation4], %s820
          %s822 = sand.u32 %s149, 1
          %s823 = smul.addr %s822, 32
          %s824 = scalar_lea.vmem [#allocation8], %s823
          %825 = dma.done %s821, 512
        $region64: #{_run_fused.1} parent=59 // pred_fallthru
          _
      $region60: #{_run_fused.1} parent=5 // pred_fallthru
        _
    $region6: #{_run_fused.1} parent=1 // loop_footer
      %s24 = sadd.s32 1, %s20
    $region7: #{_run_fused.1} parent=1 // loop_footer_branch
      %19 = sbr.rel target = $region3
    $region8: #{_run_fused.1} parent=1 // loop_exit
      _
    %826 = vsyncpa [#allocation3], 1
    %s827 = scalar_lea.sflag [#allocation3], 1
    %828 = vsyncpa %s827, 1
    %829 = vsyncpa [#allocation6], 1
    %s830 = scalar_lea.sflag [#allocation6], 1
    %831 = vsyncpa %s830, 1
    %832 = vsyncpa [#allocation4], 1
    %s833 = scalar_lea.sflag [#allocation4], 1
    %834 = vsyncpa %s833, 1

</llo_original>
